<compile_context>
chip_gen: v5e
topology: v5e:2x2
jax: 0.10.0
libtpu: 0.0.40
codegen_flags: <defaults>
</compile_context>

<pallas_src>
import jax
import jax.numpy as jnp
from jax.experimental import pallas as pl
from jax.experimental.pallas import tpu as pltpu

_SUBLANES = 8
_LANE_QUANT = 128
_TARGET_TILE_BYTES = 4 << 20   # ~4 MiB / tile -> 16 MiB live with double buffering
_MIN_GRID_DEPTH = 4            # keep the DMA pipeline in steady state


def _cov1x1x1_kernel(w_ref, b_ref, x_ref, o_ref):
    # w_ref, b_ref: (1,) f32 scalars in SMEM; x_ref / o_ref: (tile_rows, LANES) VMEM.
    w = w_ref[0]
    b = b_ref[0]
    o_ref[...] = (x_ref[...].astype(jnp.float32) * w + b).astype(o_ref.dtype)


def _round_up(v, m):
    return ((v + m - 1) // m) * m


def _pick_lanes(shape):
    """Pick a lane-dense last dim that divides the element count exactly.

    Walks the trailing-dim products (W, H*W, D*H*W, ...) and returns the first
    one that is a multiple of 128, so no padding / extra HBM traffic is needed
    for typical conv shapes.  Falls back to 128 with a tiny pad otherwise.
    """
    prod = 1
    for d in reversed(shape):
        prod *= int(d)
        if prod % _LANE_QUANT == 0:
            return prod, True
    return _LANE_QUANT, False


def _choose_tile_rows(rows, lanes, itemsize):
    if rows <= _SUBLANES:
        return rows
    # Target ~4 MiB per tile.
    tile_rows = max(_SUBLANES, _TARGET_TILE_BYTES // (lanes * itemsize))
    # Cap so the grid has >= _MIN_GRID_DEPTH steps (pipeline overlap; also gives
    # both TensorCores work if the axis is ever core-split on v7x).
    depth_cap = max(_SUBLANES, _round_up(pl.cdiv(rows, _MIN_GRID_DEPTH), _SUBLANES))
    tile_rows = min(tile_rows, depth_cap, rows)
    if tile_rows < rows:
        # (8,128) constraint: a non-full block's sublane dim must be a multiple of 8.
        tile_rows = max(_SUBLANES, (tile_rows // _SUBLANES) * _SUBLANES)
    return tile_rows


def _vmem_limit_bytes(live_bytes):
    try:
        cap = int(getattr(pltpu.get_tpu_info(), "vmem_capacity_bytes", 128 << 20))
    except Exception:
        cap = 128 << 20
    # Raise the scoped limit where the chip has headroom (v5e/v6e: 128 MiB
    # physical) but never above half of physical VMEM, so the same config also
    # fits v7x's 64 MiB per TensorCore.
    limit = min(64 << 20, cap // 2)
    return int(max(limit, min(cap, live_bytes + (4 << 20))))


def cov_layer_forward(x, weight, bias):
    """Forward pass of COV_LAYER.

    x:      (N, 1, D, H, W) float32 (NCDHW, matching PyTorch Conv3d)
    weight: scalar (from the (1, 1, 1, 1, 1) Conv3d weight)
    bias:   scalar (from the (1,) Conv3d bias)
    returns (N, 1, D, H, W) float32
    """
    orig_shape = x.shape
    assert x.ndim == 5 and orig_shape[1] == 1, "COV_LAYER expects (N, 1, D, H, W)"

    total = x.size
    itemsize = jnp.dtype(x.dtype).itemsize

    lanes, exact = _pick_lanes(orig_shape)
    flat = x.reshape(-1)
    if exact:
        rows = total // lanes
        x2d = flat.reshape(rows, lanes)          # pure metadata, no copy
    else:
        # Rare fallback (total not a multiple of 128): pad one partial row.
        rows = pl.cdiv(total, lanes)
        flat = jnp.pad(flat, (0, rows * lanes - total))
        x2d = flat.reshape(rows, lanes)

    tile_rows = _choose_tile_rows(rows, lanes, itemsize)
    grid = (pl.cdiv(rows, tile_rows),)           # ragged last block handled by Pallas
    live_bytes = 4 * tile_rows * lanes * itemsize  # 2 in + 2 out pipeline buffers

    w_arr = jnp.asarray(weight, jnp.float32).reshape(1)
    b_arr = jnp.asarray(bias, jnp.float32).reshape(1)

    out2d = pl.pallas_call(
        _cov1x1x1_kernel,
        out_shape=jax.ShapeDtypeStruct((rows, lanes), x.dtype),
        grid=grid,
        in_specs=[
            pl.BlockSpec(memory_space=pltpu.SMEM),               # weight scalar
            pl.BlockSpec(memory_space=pltpu.SMEM),               # bias scalar
            pl.BlockSpec((tile_rows, lanes), lambda i: (i, 0)),  # input tile
        ],
        out_specs=pl.BlockSpec((tile_rows, lanes), lambda i: (i, 0)),
        compiler_params=pltpu.CompilerParams(
            dimension_semantics=("parallel",),
            vmem_limit_bytes=_vmem_limit_bytes(live_bytes),
        ),
        cost_estimate=pl.CostEstimate(
            flops=2 * total,
            transcendentals=0,
            bytes_accessed=2 * total * itemsize,   # streaming read + write
        ),
    )(w_arr, b_arr, x2d)

    if exact:
        return out2d.reshape(orig_shape)
    return out2d.reshape(-1)[:total].reshape(orig_shape)


def _reference(x, weight, bias):
    # Pure-JAX reference: Conv3d(1, 1, k=1) == scalar affine.
    return x * weight + bias


if __name__ == "__main__":
    key = jax.random.PRNGKey(0)
    kx, kw, kb, kx2 = jax.random.split(key, 4)

    # nn.Conv3d(1, 1, 1) parameters: weight (1,1,1,1,1), bias (1,).
    # fan_in = 1 -> PyTorch default init is uniform(-1, 1).
    weight = jax.random.uniform(kw, (1, 1, 1, 1, 1), jnp.float32, -1.0, 1.0)
    bias = jax.random.uniform(kb, (1,), jnp.float32, -1.0, 1.0)
    w_s = weight[0, 0, 0, 0, 0]
    b_s = bias[0]

    # Small NCDHW input: batch=2, channels=1, depth=4, spatial=8x16.
    x_small = jax.random.normal(kx, (2, 1, 4, 8, 16), jnp.float32)
    y_small = jax.block_until_ready(cov_layer_forward(x_small, w_s, b_s))
    assert y_small.shape == x_small.shape
    assert jnp.allclose(y_small, _reference(x_small, w_s, b_s), atol=1e-6, rtol=1e-6)

    # Medium input that exercises the multi-step tiled pipeline (grid depth >= 4).
    x_big = jax.random.normal(kx2, (2, 1, 8, 64, 128), jnp.float32)
    y_big = jax.block_until_ready(cov_layer_forward(x_big, w_s, b_s))
    assert y_big.shape == x_big.shape
    assert jnp.allclose(y_big, _reference(x_big, w_s, b_s), atol=1e-6, rtol=1e-6)

    print("KERNEL_OK")
</pallas_src>

<mosaic_0001>
module attributes {stable_mosaic.version = 11 : i64} {
  func.func @_cov1x1x1_kernel(%arg0: i32, %arg1: memref<1xf32, #tpu.memory_space<smem>>, %arg2: memref<1xf32, #tpu.memory_space<smem>>, %arg3: memref<8x128xf32, #tpu.memory_space<vmem>>, %arg4: memref<8x128xf32, #tpu.memory_space<vmem>>) attributes {dimension_semantics = [#tpu.dimension_semantics<parallel>], iteration_bounds = array<i64: 1>, scalar_prefetch = 0 : i64, scratch_operands = 0 : i64, tpu.core_type = #tpu.core_type<tc>, window_params = [{transform_indices = @transform_0, window_bounds = array<i64: 1>}, {transform_indices = @transform_1, window_bounds = array<i64: 1>}, {transform_indices = @transform_2, window_bounds = array<i64: 8, 128>}, {transform_indices = @transform_3, window_bounds = array<i64: 8, 128>}]} {
    %c0 = arith.constant 0 : index
    %0 = memref.load %arg1[%c0] : memref<1xf32, #tpu.memory_space<smem>>
    %c0_0 = arith.constant 0 : index
    %1 = memref.load %arg2[%c0_0] : memref<1xf32, #tpu.memory_space<smem>>
    %c0_1 = arith.constant 0 : index
    %c0_2 = arith.constant 0 : index
    %2 = vector.load %arg3[%c0_1, %c0_2] : memref<8x128xf32, #tpu.memory_space<vmem>>, vector<8x128xf32>
    %3 = vector.broadcast %0 : f32 to vector<8x128xf32>
    %4 = arith.mulf %2, %3 : vector<8x128xf32>
    %5 = vector.broadcast %1 : f32 to vector<8x128xf32>
    %6 = arith.addf %4, %5 : vector<8x128xf32>
    %c0_3 = arith.constant 0 : index
    %c0_4 = arith.constant 0 : index
    %7 = vector.load %arg4[%c0_3, %c0_4] : memref<8x128xf32, #tpu.memory_space<vmem>>, vector<8x128xf32>
    tpu.vector_store %arg4[%c0_3, %c0_4], %6 {strides = array<i32>} : memref<8x128xf32, #tpu.memory_space<vmem>>, vector<8x128xf32>,
    return
  }
  func.func @transform_0(%arg0: i32) -> i32 {
    %c0_i32 = arith.constant 0 : i32
    %c0_i32_0 = arith.constant 0 : i32
    return %c0_i32 : i32
  }
  func.func @transform_1(%arg0: i32) -> i32 {
    %c0_i32 = arith.constant 0 : i32
    %c0_i32_0 = arith.constant 0 : i32
    return %c0_i32 : i32
  }
  func.func @transform_2(%arg0: i32) -> (i32, i32) {
    %c0_i32 = arith.constant 0 : i32
    %c0_i32_0 = arith.constant 0 : i32
    return %arg0, %c0_i32 : i32, i32
  }
  func.func @transform_3(%arg0: i32) -> (i32, i32) {
    %c0_i32 = arith.constant 0 : i32
    %c0_i32_0 = arith.constant 0 : i32
    return %arg0, %c0_i32 : i32, i32
  }
}

</mosaic_0001>

<llo_original>
// kernel: tpu_custom_call.1
$region0: #{tpu_custom_call.1}
  #allocation0 [shape = 'u32[]', space=smem, size = 0x4, offset = 0x4, fixed_abs, tag = 'smem constant byte address 0x4 - core index']
  #allocation1 [shape = 'u32[72,128]{1,0:T(1,128)}', space=vmem, size = 0x9000, scoped, tag = 'internal scratch']
  #allocation2 [shape = 'f32[1]{0:T(128)S(6)}', space=smem, size = 0x200, scoped, tag = 'scoped memory for tpu_custom_call.1']
  #allocation3 [shape = 'f32[1]{0:T(128)S(6)}', space=smem, size = 0x200, scoped, tag = 'scoped memory for tpu_custom_call.1']
  %s0 = inlined_call_operand.<no memory space> [shape: f32[1], index: 0, kind: input, shape index: {}]
  %s1 = inlined_call_operand.<no memory space> [shape: f32[1], index: 1, kind: input, shape index: {}]
  %s2 = inlined_call_operand.hbm [shape: f32[8,128], index: 2, kind: input, shape index: {}]
  %s3 = inlined_call_operand.hbm [shape: f32[8,128], index: 3, kind: output, shape index: {}]
  %s4 = sld [smem:[#allocation0]]
  $region26: #{tpu_custom_call.1} parent=0
    _
  %s6 = ssub.s32 1, %s4
  %s7 = scalar_select 0, %s6, %s4
  %8 = sst [smem:[#allocation2]] %s0
  %9 = sst [smem:[#allocation3]] %s1
  $region1: #{tpu_custom_call.1} parent=0
    #allocation4 [shape = 'u8[4096]{0}', space=vmem, size = 0x1000, scoped, tag = 'input window, operand 2, single buffered']
    #allocation5 [shape = 's32[1]{0}', space=sflag, size = 0x4, scoped, tag = 'scoped memory for tpu_custom_call.1']
    #allocation6 [shape = 's32[1]{0}', space=sflag, size = 0x4, scoped, tag = 'scoped memory for tpu_custom_call.1']
    #allocation7 [shape = 'u8[4096]{0}', space=vmem, size = 0x1000, scoped, tag = 'output window, operand 0, single buffered']
    %10 = vsyncpa [#allocation5], 0
    %11 = vsyncpa [#allocation6], 0
    // Predicated region
    $region2: #{tpu_custom_call.1} parent=1 // pred_check
      _
    $region3: #{tpu_custom_call.1} parent=1 // pred_check_branch
      %13 = sbr.rel (0) target = $region5
    $region4: #{tpu_custom_call.1} parent=1 // pred_region
      _
    $region5: #{tpu_custom_call.1} parent=1 // pred_fallthru
      _
    // Predicated region
    $region6: #{tpu_custom_call.1} parent=1 // pred_check
      _
    $region7: #{tpu_custom_call.1} parent=1 // pred_check_branch
      %15 = sbr.rel (0) target = $region9
    $region8: #{tpu_custom_call.1} parent=1 // pred_region
      _
    $region9: #{tpu_custom_call.1} parent=1 // pred_fallthru
      _
    // Predicated region
    $region10: #{tpu_custom_call.1} parent=1 // pred_check
      _
    $region11: #{tpu_custom_call.1} parent=1 // pred_check_branch
      %17 = sbr.rel (0) target = $region13
    $region12: #{tpu_custom_call.1} parent=1 // pred_region
      %19 = vsyncadd [#allocation5], 0
      %s21 = sshll.u32 %s2, 4
      %s22 = int_to_ptr.hbm [resolvable:$true] %s21
      %s23 = sshll.u32 [#allocation4], 4
      %s24 = int_to_ptr.vmem [resolvable:$true] %s23
      %26 = dma.hbm_to_vmem [thread:$0]  %s22, 128, %s24, [#allocation5]
    $region13: #{tpu_custom_call.1} parent=1 // pred_fallthru
      _
    // Predicated region
    $region14: #{tpu_custom_call.1} parent=1 // pred_check
      _
    $region15: #{tpu_custom_call.1} parent=1 // pred_check_branch
      %28 = sbr.rel (0) target = $region17
    $region16: #{tpu_custom_call.1} parent=1 // pred_region
      %30 = dma.done [#allocation5], 128
    $region17: #{tpu_custom_call.1} parent=1 // pred_fallthru
      _
    %s31 = sld [smem:[#allocation2]]
    %s32 = sld [smem:[#allocation3]]
    %v33 = vld [vmem:[#allocation4] sm:$0xff]
    %v34 = vstv %s31
    %v35 = vmul.f32 %v33, %v34
    %v36 = vstv %s32
    %v37 = vadd.f32 %v35, %v36
    %38 = vst [vmem:[#allocation7] sm:$0xff] %v37
    // Predicated region
    $region18: #{tpu_custom_call.1} parent=1 // pred_check
      _
    $region19: #{tpu_custom_call.1} parent=1 // pred_check_branch
      %40 = sbr.rel (0) target = $region21
    $region20: #{tpu_custom_call.1} parent=1 // pred_region
      %42 = vsyncadd [#allocation6], 0
      %s44 = sshll.u32 [#allocation7], 4
      %s45 = int_to_ptr.vmem [resolvable:$true] %s44
      %s46 = sshll.u32 %s3, 4
      %s47 = int_to_ptr.hbm [resolvable:$true] %s46
      %49 = dma.vmem_to_hbm [thread:$0]  %s45, 128, %s47, [#allocation6]
    $region21: #{tpu_custom_call.1} parent=1 // pred_fallthru
      _
    // Predicated region
    $region22: #{tpu_custom_call.1} parent=1 // pred_check
      _
    $region23: #{tpu_custom_call.1} parent=1 // pred_check_branch
      %51 = sbr.rel (0) target = $region25
    $region24: #{tpu_custom_call.1} parent=1 // pred_region
      %53 = dma.done [#allocation6], 128
    $region25: #{tpu_custom_call.1} parent=1 // pred_fallthru
      _
    %54 = vsyncpa [#allocation5], 1
    %55 = vsyncpa [#allocation6], 1

</llo_original>
